<compile_context>
chip_gen: v5e
topology: v5e:2x2
jax: 0.10.0
libtpu: 0.0.40
codegen_flags: <defaults>
</compile_context>

<pallas_src>
import functools

import jax
import jax.numpy as jnp
from jax.experimental import pallas as pl
from jax.experimental.pallas import tpu as pltpu

BN_EPS = 1e-9
NEG_BIG = -2.0 ** 31


def _r8(n):
    return -(-n // 8) * 8


def _dice_rows(x, alpha):
    """Dice on (rows, C) in f32: training-mode BatchNorm1d (biased variance,
    two-pass -> robust) + sigmoid gate. gamma=1, beta=0, eps=1e-9."""
    mean = jnp.mean(x, axis=0, keepdims=True)
    d = x - mean
    var = jnp.mean(d * d, axis=0, keepdims=True)
    x_hat = d * jax.lax.rsqrt(var + BN_EPS)
    x_p = jax.nn.sigmoid(x_hat)
    return (alpha * (1.0 - x_p) + x_p) * x


def _make_kernel(B, T, D, H1, H2, o_fp, o_q, o_2):
    BT = B * T

    def kernel(query_ref, fact_ref, mask_ref, wslab_ref, ba_ref, out_ref):
        fact3 = fact_ref[...]                               # (B,T,D) compute dtype
        q = query_ref[...]                                  # (B,D)   compute dtype
        m3 = mask_ref[...]                                  # (B,T,1) f32

        # Unpack the two pre-packed parameter slabs (one DMA each).
        w_fp = wslab_ref[o_fp:o_fp + 2 * D, :H1]            # acts on [fact, fact*q]
        w_qh = wslab_ref[o_q:o_q + D, :H1]                  # acts on q (per batch)
        w_2 = wslab_ref[o_2:o_2 + H1, :H2]
        ba = ba_ref[...]                                    # (6,Hmax) f32
        b1 = ba[0:1, :H1]
        a1 = ba[1:2, :H1]
        b2 = ba[2:3, :H2]
        a2 = ba[3:4, :H2]
        b3 = ba[4:5, 0:1]
        w3row = ba[5:6, :H2]

        # Layer 1: combo @ w1 with combo=[fact, q, fact*q, q-fact] folded as
        #   [fact, fact*q] @ [[w1_f-w1_d];[w1_p]]   (K-dense, per row)
        # +  q @ (w1_q + w1_d)                       (per batch, hoisted out of T)
        fq3 = fact3 * q[:, None, :]                                       # (B,T,D)
        x1 = jnp.concatenate([fact3, fq3], axis=-1).reshape(BT, 2 * D)
        qh = jnp.dot(q, w_qh, preferred_element_type=jnp.float32)         # (B,H1)
        h1 = jnp.dot(x1, w_fp, preferred_element_type=jnp.float32)        # (BT,H1)
        h1 = (h1.reshape(B, T, H1) + qh[:, None, :]).reshape(BT, H1) + b1
        h1 = _dice_rows(h1, a1)                                           # f32

        # Layer 2: Linear -> Dice (matmul inputs in compute dtype, stats in f32).
        h2 = jnp.dot(h1.astype(w_2.dtype), w_2,
                     preferred_element_type=jnp.float32) + b2             # (BT,H2)
        h2 = _dice_rows(h2, a2)                                           # f32

        # Final Linear(H2 -> 1) + Sigmoid on the VPU (N=1 MXU matmul is wasteful).
        logit = jnp.sum(h2 * w3row, axis=-1, keepdims=True) + b3          # (BT,1)
        scores3 = jax.nn.sigmoid(logit).reshape(B, T, 1)                  # T on sublanes

        # Masked softmax over T + attention-weighted sum (T kept on sublanes;
        # lane-dense layout only pays off at production T — see module TODO).
        s = jnp.where(m3 > 0.5, scores3, jnp.full_like(scores3, NEG_BIG))
        s = s - jnp.max(s, axis=1, keepdims=True)
        e = jnp.exp(s)
        p3 = (e / jnp.sum(e, axis=1, keepdims=True)) * m3                 # (B,T,1) f32
        out_ref[...] = jnp.sum(p3 * fact3, axis=1).astype(jnp.float32)    # (B,D)

    return kernel


def pack_params(params, compute_dtype=jnp.float32):
    """One-time parameter prep, hoisted out of the per-forward path.

    Folds the first Linear over the concat groups [fact, q, fact*q, q-fact]:
      combo @ w1 = [fact, fact*q] @ [[w1_f - w1_d]; [w1_p]] + q @ (w1_q + w1_d)
    and packs:
      * all matmul weights into ONE slab (w_fp | w_qh | w2), 8-row aligned,
        in `compute_dtype` (bf16 for the HBM-bound production path);
      * all tiny (1,N) params (b1,a1,b2,a2,b3,w3^T) into ONE (6,Hmax) f32 slab.
    """
    w1, w2, w3 = params["w1"], params["w2"], params["w3"]
    D = w1.shape[0] // 4
    H1, H2 = w1.shape[1], w2.shape[1]
    Hmax = max(H1, H2)

    w_f, w_q, w_p, w_d = w1[:D], w1[D:2 * D], w1[2 * D:3 * D], w1[3 * D:]
    w_fp = jnp.concatenate([w_f - w_d, w_p], axis=0)    # (2D,H1)
    w_qh = w_q + w_d                                    # (D,H1)

    o_fp, o_q = 0, _r8(2 * D)
    o_2 = o_q + _r8(D)
    rows = o_2 + _r8(H1)
    wslab = jnp.zeros((rows, Hmax), compute_dtype)
    wslab = wslab.at[o_fp:o_fp + 2 * D, :H1].set(w_fp.astype(compute_dtype))
    wslab = wslab.at[o_q:o_q + D, :H1].set(w_qh.astype(compute_dtype))
    wslab = wslab.at[o_2:o_2 + H1, :H2].set(w2.astype(compute_dtype))

    def padc(v):
        return jnp.pad(v, ((0, 0), (0, Hmax - v.shape[1])))

    ba = jnp.concatenate(
        [padc(params["b1"]), padc(params["a1"]),
         padc(params["b2"]), padc(params["a2"]),
         padc(params["b3"]), padc(w3.T)], axis=0).astype(jnp.float32)  # (6,Hmax)

    return wslab, ba


def attention_layer(query, fact, mask, wslab, ba, *, hidden_size):
    """query (B,D), fact (B,T,D), mask (B,T) float {0,1}; wslab/ba from
    pack_params; returns (B,D) f32."""
    B, T, D = fact.shape
    H1, H2 = hidden_size
    o_fp, o_q = 0, _r8(2 * D)
    o_2 = o_q + _r8(D)

    cdt = wslab.dtype
    # In production the activations would already live in HBM as `cdt` (bf16);
    # here the casts are tiny one-off XLA ops outside the kernel.
    query_c = query.astype(cdt)
    fact_c = fact.astype(cdt)
    mask3 = mask.reshape(B, T, 1).astype(jnp.float32)

    itm = jnp.dtype(cdt).itemsize
    flops = int(2 * B * T * (2 * D * H1 + H1 * H2 + H2 + D) + 2 * B * D * H1)
    transcendentals = int(B * T * (H1 + H2 + 2))
    bytes_accessed = int(itm * (B * T * D + B * D + wslab.size)
                         + 4 * (B * T + ba.size + B * D))

    vmem = pl.BlockSpec(memory_space=pltpu.MemorySpace.VMEM)
    kernel = _make_kernel(B, T, D, H1, H2, o_fp, o_q, o_2)

    return pl.pallas_call(
        kernel,
        out_shape=jax.ShapeDtypeStruct((B, D), jnp.float32),
        in_specs=[vmem] * 5,
        out_specs=vmem,
        cost_estimate=pl.CostEstimate(flops=flops,
                                      transcendentals=transcendentals,
                                      bytes_accessed=bytes_accessed),
    )(query_c, fact_c, mask3, wslab, ba)


def reference(query, fact, mask, params):
    """Pure-JAX reference matching the torch forward (combo materialized)."""
    B, T, D = fact.shape
    q = jnp.broadcast_to(query.reshape(B, 1, D), (B, T, D))
    combo = jnp.concatenate([fact, q, fact * q, q - fact], axis=2).reshape(B * T, 4 * D)

    def dice(x, alpha):
        mean = jnp.mean(x, axis=0, keepdims=True)
        var = jnp.mean((x - mean) ** 2, axis=0, keepdims=True)
        x_hat = (x - mean) * jax.lax.rsqrt(var + BN_EPS)
        x_p = jax.nn.sigmoid(x_hat)
        return alpha * (1.0 - x_p) * x + x_p * x

    h1 = jnp.dot(combo, params["w1"], precision=jax.lax.Precision.HIGHEST) + params["b1"]
    h1 = dice(h1, params["a1"])
    h2 = jnp.dot(h1, params["w2"], precision=jax.lax.Precision.HIGHEST) + params["b2"]
    h2 = dice(h2, params["a2"])
    logit = jnp.dot(h2, params["w3"], precision=jax.lax.Precision.HIGHEST) + params["b3"]
    scores = jax.nn.sigmoid(logit).reshape(B, T)
    scores = jnp.where(mask == 1.0, scores, jnp.full_like(scores, NEG_BIG))
    p = jax.nn.softmax(scores, axis=-1) * mask
    return jnp.einsum("bt,btd->bd", p, fact)


def init_params(key, embedding_dim, hidden_size):
    in_dim = embedding_dim * 8
    dims = [in_dim] + list(hidden_size)  # [32, 16, 8]
    ks = jax.random.split(key, 2 * len(dims))
    params = {}
    for i in range(len(dims) - 1):
        params[f"w{i+1}"] = (jax.random.normal(ks[2 * i], (dims[i], dims[i + 1]),
                                               jnp.float32) * 0.1)
        params[f"b{i+1}"] = (jax.random.normal(ks[2 * i + 1], (1, dims[i + 1]),
                                               jnp.float32) * 0.01)
        params[f"a{i+1}"] = jnp.zeros((1, dims[i + 1]), jnp.float32)
    j = len(dims) - 1
    params[f"w{j+1}"] = (jax.random.normal(ks[2 * j], (dims[-1], 1), jnp.float32) * 0.1)
    params[f"b{j+1}"] = (jax.random.normal(ks[2 * j + 1], (1, 1), jnp.float32) * 0.01)
    # TODO(synk): BatchNorm running-stats update is a training side effect with no
    # forward-output impact; it is not reproduced here.
    return params


if __name__ == "__main__":
    # combination has 4*D features and the first Linear expects embedding_dim*8,
    # so D = 2 * embedding_dim (as in the original DIN model).
    embedding_dim = 4
    D = 2 * embedding_dim           # fact feature dim = 8
    hidden_size = (16, 8)
    B, T = 2, 8

    key = jax.random.PRNGKey(0)
    kq, kf, kp = jax.random.split(key, 3)
    query = jax.random.normal(kq, (B, D), jnp.float32)
    fact = jax.random.normal(kf, (B, T, D), jnp.float32)
    # deterministic mask with some padded (zero) positions
    lengths = jnp.array([[T], [T - 3]], dtype=jnp.int32)
    mask = (jnp.arange(T)[None, :] < lengths).astype(jnp.float32)

    params = init_params(kp, embedding_dim, list(hidden_size))
    ref = reference(query, fact, mask, params)

    fwd = jax.jit(functools.partial(attention_layer, hidden_size=hidden_size))

    # f32 path (default at toy shapes).
    wslab32, ba32 = pack_params(params, jnp.float32)      # one-time param prep
    out = jax.block_until_ready(fwd(query, fact, mask, wslab32, ba32))
    assert out.shape == (B, D)
    assert jnp.allclose(out, ref, atol=2e-3, rtol=2e-3), (out, ref)

    # bf16 matmul path (HBM-bandwidth-bound production option; f32 accumulation,
    # Dice stats / softmax stay f32). Looser tolerance from bf16 input rounding.
    wslab16, ba16 = pack_params(params, jnp.bfloat16)
    out16 = jax.block_until_ready(fwd(query, fact, mask, wslab16, ba16))
    assert jnp.allclose(out16, ref, atol=6e-2, rtol=6e-2), (out16, ref)

    print("KERNEL_OK")
</pallas_src>

<mosaic_0001>
module attributes {stable_mosaic.version = 11 : i64} {
  func.func @kernel(%arg0: memref<2x8xf32, #tpu.memory_space<vmem>>, %arg1: memref<2x8x8xf32, #tpu.memory_space<vmem>>, %arg2: memref<2x8x1xf32, #tpu.memory_space<vmem>>, %arg3: memref<40x16xf32, #tpu.memory_space<vmem>>, %arg4: memref<6x16xf32, #tpu.memory_space<vmem>>, %arg5: memref<2x8xf32, #tpu.memory_space<vmem>>) attributes {dimension_semantics = [], scalar_prefetch = 0 : i64, scratch_operands = 0 : i64, tpu.core_type = #tpu.core_type<tc>} {
    %c0 = arith.constant 0 : index
    %c0_0 = arith.constant 0 : index
    %c0_1 = arith.constant 0 : index
    %0 = vector.load %arg1[%c0, %c0_0, %c0_1] : memref<2x8x8xf32, #tpu.memory_space<vmem>>, vector<2x8x8xf32>
    %c0_2 = arith.constant 0 : index
    %c0_3 = arith.constant 0 : index
    %1 = vector.load %arg0[%c0_2, %c0_3] : memref<2x8xf32, #tpu.memory_space<vmem>>, vector<2x8xf32>
    %c0_4 = arith.constant 0 : index
    %c0_5 = arith.constant 0 : index
    %c0_6 = arith.constant 0 : index
    %2 = vector.load %arg2[%c0_4, %c0_5, %c0_6] : memref<2x8x1xf32, #tpu.memory_space<vmem>>, vector<2x8x1xf32>
    %c0_7 = arith.constant 0 : index
    %c0_8 = arith.constant 0 : index
    %3 = vector.load %arg3[%c0_7, %c0_8] : memref<40x16xf32, #tpu.memory_space<vmem>>, vector<16x16xf32>
    %c16 = arith.constant 16 : index
    %c0_9 = arith.constant 0 : index
    %4 = vector.load %arg3[%c16, %c0_9] : memref<40x16xf32, #tpu.memory_space<vmem>>, vector<8x16xf32>
    %c24 = arith.constant 24 : index
    %c0_10 = arith.constant 0 : index
    %5 = vector.load %arg3[%c24, %c0_10] : memref<40x16xf32, #tpu.memory_space<vmem>>, vector<16x8xf32>
    %c0_11 = arith.constant 0 : index
    %c0_12 = arith.constant 0 : index
    %6 = vector.load %arg4[%c0_11, %c0_12] : memref<6x16xf32, #tpu.memory_space<vmem>>, vector<6x16xf32>
    %7 = vector.extract_strided_slice %6 {offsets = [0, 0], sizes = [1, 16], strides = [1, 1]} : vector<6x16xf32> to vector<1x16xf32>
    %8 = vector.extract_strided_slice %6 {offsets = [1, 0], sizes = [1, 16], strides = [1, 1]} : vector<6x16xf32> to vector<1x16xf32>
    %9 = vector.extract_strided_slice %6 {offsets = [2, 0], sizes = [1, 8], strides = [1, 1]} : vector<6x16xf32> to vector<1x8xf32>
    %10 = vector.extract_strided_slice %6 {offsets = [3, 0], sizes = [1, 8], strides = [1, 1]} : vector<6x16xf32> to vector<1x8xf32>
    %11 = vector.extract_strided_slice %6 {offsets = [4, 0], sizes = [1, 1], strides = [1, 1]} : vector<6x16xf32> to vector<1x1xf32>
    %12 = vector.extract_strided_slice %6 {offsets = [5, 0], sizes = [1, 8], strides = [1, 1]} : vector<6x16xf32> to vector<1x8xf32>
    %13 = vector.shape_cast %1 : vector<2x8xf32> to vector<2x1x8xf32>
    %14 = vector.broadcast %13 : vector<2x1x8xf32> to vector<2x8x8xf32>
    %15 = arith.mulf %0, %14 : vector<2x8x8xf32>
    %16 = tpu.concatenate %0, %15 in 2 : vector<2x8x8xf32>, vector<2x8x8xf32> -> vector<2x8x16xf32>
    %17 = vector.shape_cast %16 : vector<2x8x16xf32> to vector<16x16xf32>
    %cst = arith.constant dense<0.000000e+00> : vector<2x16xf32>
    %18 = tpu.matmul %1, %4, %cst {dimension_numbers = #tpu.dot_dimension_numbers<[1], [0], [0], [1], [0, 0, 1, 1], [], []>} : vector<2x8xf32>, vector<8x16xf32>, vector<2x16xf32> -> vector<2x16xf32>
    %cst_13 = arith.constant dense<0.000000e+00> : vector<16x16xf32>
    %19 = tpu.matmul %17, %3, %cst_13 {dimension_numbers = #tpu.dot_dimension_numbers<[1], [0], [0], [1], [0, 0, 1, 1], [], []>} : vector<16x16xf32>, vector<16x16xf32>, vector<16x16xf32> -> vector<16x16xf32>
    %20 = vector.shape_cast %19 : vector<16x16xf32> to vector<2x8x16xf32>
    %21 = vector.shape_cast %18 : vector<2x16xf32> to vector<2x1x16xf32>
    %22 = vector.broadcast %21 : vector<2x1x16xf32> to vector<2x8x16xf32>
    %23 = arith.addf %20, %22 : vector<2x8x16xf32>
    %24 = vector.shape_cast %23 : vector<2x8x16xf32> to vector<16x16xf32>
    %25 = vector.broadcast %7 : vector<1x16xf32> to vector<16x16xf32>
    %26 = arith.addf %24, %25 : vector<16x16xf32>
    %cst_14 = arith.constant dense<0.000000e+00> : vector<16xf32>
    %27 = vector.multi_reduction <add>, %26, %cst_14 [0] : vector<16x16xf32> to vector<16xf32>
    %28 = vector.shape_cast %27 : vector<16xf32> to vector<1x16xf32>
    %cst_15 = arith.constant 1.600000e+01 : f32
    %29 = vector.broadcast %cst_15 : f32 to vector<1x16xf32>
    %30 = arith.divf %28, %29 : vector<1x16xf32>
    %31 = vector.broadcast %30 : vector<1x16xf32> to vector<16x16xf32>
    %32 = arith.subf %26, %31 : vector<16x16xf32>
    %33 = arith.mulf %32, %32 : vector<16x16xf32>
    %cst_16 = arith.constant dense<0.000000e+00> : vector<16xf32>
    %34 = vector.multi_reduction <add>, %33, %cst_16 [0] : vector<16x16xf32> to vector<16xf32>
    %35 = vector.shape_cast %34 : vector<16xf32> to vector<1x16xf32>
    %cst_17 = arith.constant 1.600000e+01 : f32
    %36 = vector.broadcast %cst_17 : f32 to vector<1x16xf32>
    %37 = arith.divf %35, %36 : vector<1x16xf32>
    %cst_18 = arith.constant 9.99999971E-10 : f32
    %38 = vector.broadcast %cst_18 : f32 to vector<1x16xf32>
    %39 = arith.addf %37, %38 : vector<1x16xf32>
    %40 = math.rsqrt %39 : vector<1x16xf32>
    %41 = vector.broadcast %40 : vector<1x16xf32> to vector<16x16xf32>
    %42 = arith.mulf %32, %41 : vector<16x16xf32>
    %43 = arith.negf %42 : vector<16x16xf32>
    %44 = math.exp %43 : vector<16x16xf32>
    %cst_19 = arith.constant 1.000000e+00 : f32
    %45 = vector.broadcast %cst_19 : f32 to vector<16x16xf32>
    %46 = arith.addf %45, %44 : vector<16x16xf32>
    %47 = arith.divf %45, %46 : vector<16x16xf32>
    %cst_20 = arith.constant 1.000000e+00 : f32
    %48 = vector.broadcast %cst_20 : f32 to vector<16x16xf32>
    %49 = arith.subf %48, %47 : vector<16x16xf32>
    %50 = vector.broadcast %8 : vector<1x16xf32> to vector<16x16xf32>
    %51 = arith.mulf %50, %49 : vector<16x16xf32>
    %52 = arith.addf %51, %47 : vector<16x16xf32>
    %53 = arith.mulf %52, %26 : vector<16x16xf32>
    %cst_21 = arith.constant dense<0.000000e+00> : vector<16x8xf32>
    %54 = tpu.matmul %53, %5, %cst_21 {dimension_numbers = #tpu.dot_dimension_numbers<[1], [0], [0], [1], [0, 0, 1, 1], [], []>} : vector<16x16xf32>, vector<16x8xf32>, vector<16x8xf32> -> vector<16x8xf32>
    %55 = vector.broadcast %9 : vector<1x8xf32> to vector<16x8xf32>
    %56 = arith.addf %54, %55 : vector<16x8xf32>
    %cst_22 = arith.constant dense<0.000000e+00> : vector<8xf32>
    %57 = vector.multi_reduction <add>, %56, %cst_22 [0] : vector<16x8xf32> to vector<8xf32>
    %58 = vector.shape_cast %57 : vector<8xf32> to vector<1x8xf32>
    %cst_23 = arith.constant 1.600000e+01 : f32
    %59 = vector.broadcast %cst_23 : f32 to vector<1x8xf32>
    %60 = arith.divf %58, %59 : vector<1x8xf32>
    %61 = vector.broadcast %60 : vector<1x8xf32> to vector<16x8xf32>
    %62 = arith.subf %56, %61 : vector<16x8xf32>
    %63 = arith.mulf %62, %62 : vector<16x8xf32>
    %cst_24 = arith.constant dense<0.000000e+00> : vector<8xf32>
    %64 = vector.multi_reduction <add>, %63, %cst_24 [0] : vector<16x8xf32> to vector<8xf32>
    %65 = vector.shape_cast %64 : vector<8xf32> to vector<1x8xf32>
    %cst_25 = arith.constant 1.600000e+01 : f32
    %66 = vector.broadcast %cst_25 : f32 to vector<1x8xf32>
    %67 = arith.divf %65, %66 : vector<1x8xf32>
    %cst_26 = arith.constant 9.99999971E-10 : f32
    %68 = vector.broadcast %cst_26 : f32 to vector<1x8xf32>
    %69 = arith.addf %67, %68 : vector<1x8xf32>
    %70 = math.rsqrt %69 : vector<1x8xf32>
    %71 = vector.broadcast %70 : vector<1x8xf32> to vector<16x8xf32>
    %72 = arith.mulf %62, %71 : vector<16x8xf32>
    %73 = arith.negf %72 : vector<16x8xf32>
    %74 = math.exp %73 : vector<16x8xf32>
    %cst_27 = arith.constant 1.000000e+00 : f32
    %75 = vector.broadcast %cst_27 : f32 to vector<16x8xf32>
    %76 = arith.addf %75, %74 : vector<16x8xf32>
    %77 = arith.divf %75, %76 : vector<16x8xf32>
    %cst_28 = arith.constant 1.000000e+00 : f32
    %78 = vector.broadcast %cst_28 : f32 to vector<16x8xf32>
    %79 = arith.subf %78, %77 : vector<16x8xf32>
    %80 = vector.broadcast %10 : vector<1x8xf32> to vector<16x8xf32>
    %81 = arith.mulf %80, %79 : vector<16x8xf32>
    %82 = arith.addf %81, %77 : vector<16x8xf32>
    %83 = arith.mulf %82, %56 : vector<16x8xf32>
    %84 = vector.broadcast %12 : vector<1x8xf32> to vector<16x8xf32>
    %85 = arith.mulf %83, %84 : vector<16x8xf32>
    %cst_29 = arith.constant dense<0.000000e+00> : vector<16xf32>
    %86 = vector.multi_reduction <add>, %85, %cst_29 [1] : vector<16x8xf32> to vector<16xf32>
    %87 = vector.shape_cast %86 : vector<16xf32> to vector<16x1xf32>
    %88 = vector.broadcast %11 : vector<1x1xf32> to vector<16x1xf32>
    %89 = arith.addf %87, %88 : vector<16x1xf32>
    %90 = arith.negf %89 : vector<16x1xf32>
    %91 = math.exp %90 : vector<16x1xf32>
    %cst_30 = arith.constant 1.000000e+00 : f32
    %92 = vector.broadcast %cst_30 : f32 to vector<16x1xf32>
    %93 = arith.addf %92, %91 : vector<16x1xf32>
    %94 = arith.divf %92, %93 : vector<16x1xf32>
    %95 = vector.shape_cast %94 : vector<16x1xf32> to vector<2x8x1xf32>
    %cst_31 = arith.constant 5.000000e-01 : f32
    %96 = vector.broadcast %cst_31 : f32 to vector<2x8x1xf32>
    %97 = arith.cmpf ogt, %2, %96 : vector<2x8x1xf32>
    %cst_32 = arith.constant -2.14748365E+9 : f32
    %98 = vector.broadcast %cst_32 : f32 to vector<2x8x1xf32>
    %99 = arith.select %97, %95, %98 : vector<2x8x1xi1>, vector<2x8x1xf32>
    %cst_33 = arith.constant dense<0xFF800000> : vector<2x1xf32>
    %100 = vector.multi_reduction <maximumf>, %99, %cst_33 [1] : vector<2x8x1xf32> to vector<2x1xf32>
    %101 = vector.shape_cast %100 : vector<2x1xf32> to vector<2x1x1xf32>
    %102 = vector.broadcast %101 : vector<2x1x1xf32> to vector<2x8x1xf32>
    %103 = arith.subf %99, %102 : vector<2x8x1xf32>
    %104 = math.exp %103 : vector<2x8x1xf32>
    %cst_34 = arith.constant dense<0.000000e+00> : vector<2x1xf32>
    %105 = vector.multi_reduction <add>, %104, %cst_34 [1] : vector<2x8x1xf32> to vector<2x1xf32>
    %106 = vector.shape_cast %105 : vector<2x1xf32> to vector<2x1x1xf32>
    %107 = vector.broadcast %106 : vector<2x1x1xf32> to vector<2x8x1xf32>
    %108 = arith.divf %104, %107 : vector<2x8x1xf32>
    %109 = arith.mulf %108, %2 : vector<2x8x1xf32>
    %110 = vector.broadcast %109 : vector<2x8x1xf32> to vector<2x8x8xf32>
    %111 = arith.mulf %110, %0 : vector<2x8x8xf32>
    %cst_35 = arith.constant dense<0.000000e+00> : vector<2x8xf32>
    %112 = vector.multi_reduction <add>, %111, %cst_35 [1] : vector<2x8x8xf32> to vector<2x8xf32>
    %c0_36 = arith.constant 0 : index
    %c0_37 = arith.constant 0 : index
    %113 = vector.load %arg5[%c0_36, %c0_37] : memref<2x8xf32, #tpu.memory_space<vmem>>, vector<2x8xf32>
    tpu.vector_store %arg5[%c0_36, %c0_37], %112 {strides = array<i32>} : memref<2x8xf32, #tpu.memory_space<vmem>>, vector<2x8xf32>,
    return
  }
}

</mosaic_0001>

<llo_original>
// kernel: attention_layer.1
$region0: #{attention_layer.1}
  #allocation0 [shape = 'u32[]', space=smem, size = 0x4, offset = 0x4, fixed_abs, tag = 'smem constant byte address 0x4 - core index']
  #allocation1 [shape = 'u32[72,128]{1,0:T(1,128)}', space=vmem, size = 0x9000, scoped, tag = 'internal scratch']
  %s0 = inlined_call_operand.vmem [shape: f32[2,8], index: 0, kind: input, shape index: {}]
  %s1 = inlined_call_operand.vmem [shape: f32[2,8,8], index: 1, kind: input, shape index: {}]
  %s2 = inlined_call_operand.vmem [shape: f32[2,8,1], index: 2, kind: input, shape index: {}]
  %s3 = inlined_call_operand.vmem [shape: f32[40,16], index: 3, kind: input, shape index: {}]
  %s4 = inlined_call_operand.vmem [shape: f32[6,16], index: 4, kind: input, shape index: {}]
  %s5 = inlined_call_operand.hbm [shape: f32[2,8], index: 5, kind: output, shape index: {}]
  %s6 = sld [smem:[#allocation0]]
  $region30: #{attention_layer.1} parent=0
    _
  %s8 = ssub.s32 1, %s6
  %s9 = scalar_select 0, %s8, %s6
  $region1: #{attention_layer.1} parent=0
    #allocation2 [shape = 'u8[1024]{0}', space=vmem, size = 0x400, scoped, tag = 'output window, operand 0, single buffered']
    #allocation3 [shape = 's32[1]{0}', space=sflag, size = 0x4, scoped, tag = 'scoped memory for attention_layer.1']
    %10 = vsyncpa [#allocation3], 0
    // Predicated region
    $region2: #{attention_layer.1} parent=1 // pred_check
      _
    $region3: #{attention_layer.1} parent=1 // pred_check_branch
      %12 = sbr.rel (0) target = $region5
    $region4: #{attention_layer.1} parent=1 // pred_region
      _
    $region5: #{attention_layer.1} parent=1 // pred_fallthru
      _
    // Predicated region
    $region6: #{attention_layer.1} parent=1 // pred_check
      _
    $region7: #{attention_layer.1} parent=1 // pred_check_branch
      %14 = sbr.rel (0) target = $region9
    $region8: #{attention_layer.1} parent=1 // pred_region
      _
    $region9: #{attention_layer.1} parent=1 // pred_fallthru
      _
    // Predicated region
    $region10: #{attention_layer.1} parent=1 // pred_check
      _
    $region11: #{attention_layer.1} parent=1 // pred_check_branch
      %16 = sbr.rel (0) target = $region13
    $region12: #{attention_layer.1} parent=1 // pred_region
      _
    $region13: #{attention_layer.1} parent=1 // pred_fallthru
      _
    // Predicated region
    $region14: #{attention_layer.1} parent=1 // pred_check
      _
    $region15: #{attention_layer.1} parent=1 // pred_check_branch
      %18 = sbr.rel (0) target = $region17
    $region16: #{attention_layer.1} parent=1 // pred_region
      _
    $region17: #{attention_layer.1} parent=1 // pred_fallthru
      _
    // Predicated region
    $region18: #{attention_layer.1} parent=1 // pred_check
      _
    $region19: #{attention_layer.1} parent=1 // pred_check_branch
      %20 = sbr.rel (0) target = $region21
    $region20: #{attention_layer.1} parent=1 // pred_region
      _
    $region21: #{attention_layer.1} parent=1 // pred_fallthru
      _
    %v21 = vld [vmem:[%s1] sm:$0xff]
    %v22 = vld [vmem:[%s1 + $0x8] sm:$0xff]
    %v23 = vld [vmem:[%s0] sm:$0x3]
    %v24 = vld [vmem:[%s2] sm:$0xff]
    %v25 = vld [vmem:[%s2 + $0x8] sm:$0xff]
    %v26 = vld [vmem:[%s3] sm:$0xff]
    %v27 = vld [vmem:[%s3 + $0x8] sm:$0xff]
    %v28 = vld [vmem:[%s3 + $0x10] sm:$0xff]
    %v29 = vld [vmem:[%s3 + $0x18] sm:$0xff]
    %v30 = vld [vmem:[%s3 + $0x20] sm:$0xff]
    %v31 = vld [vmem:[%s4] sm:$0x3f]
    %v33 = vrot.slane %v23, 1
    %v34 = vperm.slane %v23, 0
    %v35 = vperm.slane %v33, 0
    %v38 = vmul.f32 %v21, %v34
    %v39 = vmul.f32 %v22, %v35
    %42 = vrot.lane.b32.xlu0 %v38, 8
    %v43 = vpop.permute.xlu0 %42
    %44 = vrot.lane.b32.xlu0 %v39, 8
    %v45 = vpop.permute.xlu0 %44
    %vm48 = vcmask 64512
    %v49 = vsel %vm48, %v21, %v43
    %v50 = vsel %vm48, %v22, %v45
    %v51 = vsel %vm48, %v23, 0
    %53 = vmatpush.msra.mxu0 0.0
    %54 = vmatpush.msra.mxu0 0.0
    %55 = vmatpush.msra.mxu0 0.0
    %56 = vmatpush.msra.mxu0 0.0
    %57 = vmatpush.msra.mxu0 0.0
    %58 = vmatpush.msra.mxu0 0.0
    %59 = vmatpush.msra.mxu0 0.0
    %60 = vmatpush.msra.mxu0 0.0
    %61 = vmatpush.msra.mxu0 0.0
    %62 = vmatpush.msra.mxu0 0.0
    %63 = vmatpush.msra.mxu0 0.0
    %64 = vmatpush.msra.mxu0 0.0
    %65 = vmatpush.msra.mxu0 0.0
    %66 = vmatpush.msra.mxu0 0.0
    %67 = vmatpush.msra.mxu0 0.0
    %68 = vmatpush.msra.mxu0 %v28
    %69 = vmatmul.f32.gmra.mxu0 %v51
    %v70 = vpop.f32.mrf.mxu0
    %v71 = vadd.f32 0.0, %v70
    %72 = vdwg.mxu0
    %vm73 = vcmask 130048
    %v75 = vsel %vm73, %v49, 0
    %v78 = vsel %vm73, %v50, 0
    %80 = vmatpush.msra.mxu0 0.0
    %81 = vmatpush.msra.mxu0 0.0
    %82 = vmatpush.msra.mxu0 0.0
    %83 = vmatpush.msra.mxu0 0.0
    %84 = vmatpush.msra.mxu0 0.0
    %85 = vmatpush.msra.mxu0 0.0
    %86 = vmatpush.msra.mxu0 0.0
    %87 = vmatpush.msra.mxu0 0.0
    %88 = vmatpush.msra.mxu0 0.0
    %89 = vmatpush.msra.mxu0 0.0
    %90 = vmatpush.msra.mxu0 0.0
    %91 = vmatpush.msra.mxu0 0.0
    %92 = vmatpush.msra.mxu0 0.0
    %93 = vmatpush.msra.mxu0 0.0
    %94 = vmatpush.msra.mxu0 %v27
    %95 = vmatpush.msra.mxu0 %v26
    %96 = vmatmul.f32.gmra.mxu0 %v75
    %v97 = vpop.f32.mrf.mxu0
    %v98 = vadd.f32 0.0, %v97
    %99 = vmatmul.f32.gmra.mxu0 %v78
    %v100 = vpop.f32.mrf.mxu0
    %v101 = vadd.f32 0.0, %v100
    %102 = vdwg.mxu0
    %v104 = vrot.slane %v71, 1
    %v105 = vperm.slane %v71, 0
    %v106 = vperm.slane %v104, 0
    %v109 = vadd.f32 %v98, %v105
    %v110 = vadd.f32 %v101, %v106
    %v111 = vperm.slane %v31, 0
    %v112 = vadd.f32 %v109, %v111
    %v113 = vadd.f32 %v110, %v111
    %v114 = vsel %vm73, %v112, 0.0
    %v115 = vsel %vm73, %v113, 0.0
    %v116 = vadd.f32 %v114, %v115
    %v117 = vrot.slane %v116, 4
    %v118 = vadd.f32 %v116, %v117
    %v119 = vrot.slane %v118, 2
    %v120 = vadd.f32 %v118, %v119
    %v121 = vrot.slane %v120, 1
    %v122 = vadd.f32 %v120, %v121
    %v123 = vrcp.pop 16.0
    %v124 = vmul.f32 16.0, %v123
    %v125 = vsub.f32 1.0, %v124
    %v126 = vmul.f32 %v123, %v125
    %v127 = vadd.f32 %v123, %v126
    %vm128 = vweird.f32 %v123
    %v129 = vsel %vm128, %v123, %v127
    %v130 = vmul.f32 %v122, %v129
    %v131 = vsub.f32 %v112, %v130
    %v132 = vsub.f32 %v113, %v130
    %v133 = vmul.f32 %v131, %v131
    %v134 = vmul.f32 %v132, %v132
    %v135 = vsel %vm73, %v133, 0.0
    %v136 = vsel %vm73, %v134, 0.0
    %v137 = vadd.f32 %v135, %v136
    %v138 = vrot.slane %v137, 4
    %v139 = vadd.f32 %v137, %v138
    %v140 = vrot.slane %v139, 2
    %v141 = vadd.f32 %v139, %v140
    %v142 = vrot.slane %v141, 1
    %v143 = vadd.f32 %v141, %v142
    %v144 = vmul.f32 %v143, %v129
    %v145 = vadd.f32 %v144, 1e-09
    %v146 = vrsqrt.pop %v145
    %v147 = vmul.f32 %v146, %v145
    %v148 = vmul.f32 %v147, %v146
    %v149 = vmul.f32 0.5, %v148
    %v150 = vsub.f32 1.5, %v149
    %v151 = vmul.f32 %v146, %v150
    %vm152 = vweird.f32 %v145
    %vm153 = vweird.f32 %v146
    %vm154 = vmor %vm152, %vm153
    %v155 = vsel %vm154, %v146, %v151
    %v156 = vmul.f32 %v131, %v155
    %v157 = vmul.f32 %v132, %v155
    %v158 = vxor.u32 %v156, 2147483648
    %v159 = vxor.u32 %v157, 2147483648
    %v160 = vmul.f32 %v158, 1.442695
    %v161 = vpow.pop %v160
    %v162 = vmul.f32 %v159, 1.442695
    %v163 = vpow.pop %v162
    %v164 = vadd.f32 %v161, 1.0
    %v165 = vadd.f32 %v163, 1.0
    %v166 = vrcp.pop %v164
    %v167 = vmul.f32 %v164, %v166
    %v168 = vsub.f32 1.0, %v167
    %v169 = vmul.f32 %v166, %v168
    %v170 = vadd.f32 %v166, %v169
    %vm171 = vweird.f32 %v164
    %vm172 = vweird.f32 %v166
    %vm173 = vmor %vm171, %vm172
    %v174 = vsel %vm173, %v166, %v170
    %v175 = vand.u32 2147483647, %v164
    %vm176 = vcmp.eq.f32.partialorder %v175, 8.507059e+37
    %v177 = vand.u32 %v164, 2147483648
    %v178 = vor.u32 1.1754944e-38, %v177
    %v179 = vsel %vm176, %v178, %v174
    %v180 = vmul.f32 1.0, %v179
    %v181 = vrcp.pop %v165
    %v182 = vmul.f32 %v165, %v181
    %v183 = vsub.f32 1.0, %v182
    %v184 = vmul.f32 %v181, %v183
    %v185 = vadd.f32 %v181, %v184
    %vm186 = vweird.f32 %v165
    %vm187 = vweird.f32 %v181
    %vm188 = vmor %vm186, %vm187
    %v189 = vsel %vm188, %v181, %v185
    %v190 = vand.u32 2147483647, %v165
    %vm191 = vcmp.eq.f32.partialorder %v190, 8.507059e+37
    %v192 = vand.u32 %v165, 2147483648
    %v193 = vor.u32 1.1754944e-38, %v192
    %v194 = vsel %vm191, %v193, %v189
    %v195 = vmul.f32 1.0, %v194
    %v196 = vsub.f32 1.0, %v180
    %v197 = vsub.f32 1.0, %v195
    %v198 = vperm.slane %v31, 1
    %v199 = vmul.f32 %v198, %v196
    %v200 = vmul.f32 %v198, %v197
    %v201 = vadd.f32 %v199, %v180
    %v202 = vadd.f32 %v200, %v195
    %v203 = vmul.f32 %v201, %v112
    %v204 = vmul.f32 %v202, %v113
    %v205 = vperm.slane %v31, 2
    %v207 = vsel %vm73, %v203, 0
    %v210 = vsel %vm73, %v204, 0
    %212 = vmatpush.msra.mxu0 0.0
    %213 = vmatpush.msra.mxu0 0.0
    %214 = vmatpush.msra.mxu0 0.0
    %215 = vmatpush.msra.mxu0 0.0
    %216 = vmatpush.msra.mxu0 0.0
    %217 = vmatpush.msra.mxu0 0.0
    %218 = vmatpush.msra.mxu0 0.0
    %219 = vmatpush.msra.mxu0 0.0
    %220 = vmatpush.msra.mxu0 0.0
    %221 = vmatpush.msra.mxu0 0.0
    %222 = vmatpush.msra.mxu0 0.0
    %223 = vmatpush.msra.mxu0 0.0
    %224 = vmatpush.msra.mxu0 0.0
    %225 = vmatpush.msra.mxu0 0.0
    %226 = vmatpush.msra.mxu0 %v30
    %227 = vmatpush.msra.mxu0 %v29
    %228 = vmatmul.f32.gmra.mxu0 %v207
    %v229 = vpop.f32.mrf.mxu0
    %v230 = vadd.f32 %v205, %v229
    %231 = vmatmul.f32.gmra.mxu0 %v210
    %v232 = vpop.f32.mrf.mxu0
    %v233 = vadd.f32 %v205, %v232
    %234 = vdwg.mxu0
    %v235 = vsel %vm48, %v230, 0.0
    %v236 = vsel %vm48, %v233, 0.0
    %v237 = vadd.f32 %v235, %v236
    %v238 = vrot.slane %v237, 4
    %v239 = vadd.f32 %v237, %v238
    %v240 = vrot.slane %v239, 2
    %v241 = vadd.f32 %v239, %v240
    %v242 = vrot.slane %v241, 1
    %v243 = vadd.f32 %v241, %v242
    %v244 = vmul.f32 %v243, %v129
    %v245 = vsub.f32 %v230, %v244
    %v246 = vsub.f32 %v233, %v244
    %v247 = vmul.f32 %v245, %v245
    %v248 = vmul.f32 %v246, %v246
    %v249 = vsel %vm48, %v247, 0.0
    %v250 = vsel %vm48, %v248, 0.0
    %v251 = vadd.f32 %v249, %v250
    %v252 = vrot.slane %v251, 4
    %v253 = vadd.f32 %v251, %v252
    %v254 = vrot.slane %v253, 2
    %v255 = vadd.f32 %v253, %v254
    %v256 = vrot.slane %v255, 1
    %v257 = vadd.f32 %v255, %v256
    %v258 = vmul.f32 %v257, %v129
    %v259 = vadd.f32 %v258, 1e-09
    %v260 = vrsqrt.pop %v259
    %v261 = vmul.f32 %v260, %v259
    %v262 = vmul.f32 %v261, %v260
    %v263 = vmul.f32 0.5, %v262
    %v264 = vsub.f32 1.5, %v263
    %v265 = vmul.f32 %v260, %v264
    %vm266 = vweird.f32 %v259
    %vm267 = vweird.f32 %v260
    %vm268 = vmor %vm266, %vm267
    %v269 = vsel %vm268, %v260, %v265
    %v270 = vmul.f32 %v245, %v269
    %v271 = vmul.f32 %v246, %v269
    %v272 = vxor.u32 %v270, 2147483648
    %v273 = vxor.u32 %v271, 2147483648
    %v274 = vmul.f32 %v272, 1.442695
    %v275 = vpow.pop %v274
    %v276 = vmul.f32 %v273, 1.442695
    %v277 = vpow.pop %v276
    %v278 = vadd.f32 %v275, 1.0
    %v279 = vadd.f32 %v277, 1.0
    %v280 = vrcp.pop %v278
    %v281 = vmul.f32 %v278, %v280
    %v282 = vsub.f32 1.0, %v281
    %v283 = vmul.f32 %v280, %v282
    %v284 = vadd.f32 %v280, %v283
    %vm285 = vweird.f32 %v278
    %vm286 = vweird.f32 %v280
    %vm287 = vmor %vm285, %vm286
    %v288 = vsel %vm287, %v280, %v284
    %v289 = vand.u32 2147483647, %v278
    %vm290 = vcmp.eq.f32.partialorder %v289, 8.507059e+37
    %v291 = vand.u32 %v278, 2147483648
    %v292 = vor.u32 1.1754944e-38, %v291
    %v293 = vsel %vm290, %v292, %v288
    %v294 = vmul.f32 1.0, %v293
    %v295 = vrcp.pop %v279
    %v296 = vmul.f32 %v279, %v295
    %v297 = vsub.f32 1.0, %v296
    %v298 = vmul.f32 %v295, %v297
    %v299 = vadd.f32 %v295, %v298
    %vm300 = vweird.f32 %v279
    %vm301 = vweird.f32 %v295
    %vm302 = vmor %vm300, %vm301
    %v303 = vsel %vm302, %v295, %v299
    %v304 = vand.u32 2147483647, %v279
    %vm305 = vcmp.eq.f32.partialorder %v304, 8.507059e+37
    %v306 = vand.u32 %v279, 2147483648
    %v307 = vor.u32 1.1754944e-38, %v306
    %v308 = vsel %vm305, %v307, %v303
    %v309 = vmul.f32 1.0, %v308
    %v310 = vsub.f32 1.0, %v294
    %v311 = vsub.f32 1.0, %v309
    %v312 = vperm.slane %v31, 3
    %v313 = vmul.f32 %v312, %v310
    %v314 = vmul.f32 %v312, %v311
    %v315 = vadd.f32 %v313, %v294
    %v316 = vadd.f32 %v314, %v309
    %v317 = vmul.f32 %v315, %v230
    %v318 = vmul.f32 %v316, %v233
    %v319 = vperm.slane %v31, 5
    %v320 = vmul.f32 %v317, %v319
    %v321 = vmul.f32 %v318, %v319
    %v322 = vsel %vm48, %v320, 0.0
    %323 = vadd.xlane.f32.xlu0 %v322
    %v324 = vpop.xlane.xlu0 %323
    %v325 = vsel %vm48, %v321, 0.0
    %326 = vadd.xlane.f32.xlu0 %v325
    %v327 = vpop.xlane.xlu0 %326
    %v328 = vperm.slane %v31, 4
    %v329 = vadd.f32 %v324, %v328
    %v330 = vadd.f32 %v327, %v328
    %v331 = vxor.u32 %v329, 2147483648
    %v332 = vxor.u32 %v330, 2147483648
    %v333 = vmul.f32 %v331, 1.442695
    %v334 = vpow.pop %v333
    %v335 = vmul.f32 %v332, 1.442695
    %v336 = vpow.pop %v335
    %v337 = vadd.f32 %v334, 1.0
    %v338 = vadd.f32 %v336, 1.0
    %v339 = vrcp.pop %v337
    %v340 = vmul.f32 %v337, %v339
    %v341 = vsub.f32 1.0, %v340
    %v342 = vmul.f32 %v339, %v341
    %v343 = vadd.f32 %v339, %v342
    %vm344 = vweird.f32 %v337
    %vm345 = vweird.f32 %v339
    %vm346 = vmor %vm344, %vm345
    %v347 = vsel %vm346, %v339, %v343
    %v348 = vand.u32 2147483647, %v337
    %vm349 = vcmp.eq.f32.partialorder %v348, 8.507059e+37
    %v350 = vand.u32 %v337, 2147483648
    %v351 = vor.u32 1.1754944e-38, %v350
    %v352 = vsel %vm349, %v351, %v347
    %v353 = vmul.f32 1.0, %v352
    %v354 = vrcp.pop %v338
    %v355 = vmul.f32 %v338, %v354
    %v356 = vsub.f32 1.0, %v355
    %v357 = vmul.f32 %v354, %v356
    %v358 = vadd.f32 %v354, %v357
    %vm359 = vweird.f32 %v338
    %vm360 = vweird.f32 %v354
    %vm361 = vmor %vm359, %vm360
    %v362 = vsel %vm361, %v354, %v358
    %v363 = vand.u32 2147483647, %v338
    %vm364 = vcmp.eq.f32.partialorder %v363, 8.507059e+37
    %v365 = vand.u32 %v338, 2147483648
    %v366 = vor.u32 1.1754944e-38, %v365
    %v367 = vsel %vm364, %v366, %v362
    %v368 = vmul.f32 1.0, %v367
    %vm369 = vcmp.gt.f32.partialorder %v24, 0.5
    %vm370 = vcmp.gt.f32.partialorder %v25, 0.5
    %v371 = vsel %vm369, %v353, -2.1474836e+09
    %v372 = vsel %vm370, %v368, -2.1474836e+09
    %vm373 = vcmask 7168
    %v374 = vsel %vm373, %v371, -inf
    %v375 = vrot.slane %v374, 4
    %v376 = vmax.f32 %v374, %v375
    %v377 = vrot.slane %v376, 2
    %v378 = vmax.f32 %v376, %v377
    %v379 = vrot.slane %v378, 1
    %v380 = vmax.f32 %v378, %v379
    %v381 = vsel %vm373, %v372, -inf
    %v382 = vrot.slane %v381, 4
    %v383 = vmax.f32 %v381, %v382
    %v384 = vrot.slane %v383, 2
    %v385 = vmax.f32 %v383, %v384
    %v386 = vrot.slane %v385, 1
    %v387 = vmax.f32 %v385, %v386
    %v388 = vsub.f32 %v371, %v380
    %v389 = vsub.f32 %v372, %v387
    %v390 = vmul.f32 %v388, 1.442695
    %v391 = vpow.pop %v390
    %v392 = vmul.f32 %v389, 1.442695
    %v393 = vpow.pop %v392
    %v394 = vsel %vm373, %v391, 0.0
    %v395 = vrot.slane %v394, 4
    %v396 = vadd.f32 %v394, %v395
    %v397 = vrot.slane %v396, 2
    %v398 = vadd.f32 %v396, %v397
    %v399 = vrot.slane %v398, 1
    %v400 = vadd.f32 %v398, %v399
    %v401 = vsel %vm373, %v393, 0.0
    %v402 = vrot.slane %v401, 4
    %v403 = vadd.f32 %v401, %v402
    %v404 = vrot.slane %v403, 2
    %v405 = vadd.f32 %v403, %v404
    %v406 = vrot.slane %v405, 1
    %v407 = vadd.f32 %v405, %v406
    %v408 = vrcp.pop %v400
    %v409 = vmul.f32 %v400, %v408
    %v410 = vsub.f32 1.0, %v409
    %v411 = vmul.f32 %v408, %v410
    %v412 = vadd.f32 %v408, %v411
    %vm413 = vweird.f32 %v400
    %vm414 = vweird.f32 %v408
    %vm415 = vmor %vm413, %vm414
    %v416 = vsel %vm415, %v408, %v412
    %v417 = vand.u32 2147483647, %v400
    %vm418 = vcmp.eq.f32.partialorder %v417, 8.507059e+37
    %v419 = vand.u32 %v400, 2147483648
    %v420 = vor.u32 1.1754944e-38, %v419
    %v421 = vsel %vm418, %v420, %v416
    %v422 = vmul.f32 %v391, %v421
    %v423 = vrcp.pop %v407
    %v424 = vmul.f32 %v407, %v423
    %v425 = vsub.f32 1.0, %v424
    %v426 = vmul.f32 %v423, %v425
    %v427 = vadd.f32 %v423, %v426
    %vm428 = vweird.f32 %v407
    %vm429 = vweird.f32 %v423
    %vm430 = vmor %vm428, %vm429
    %v431 = vsel %vm430, %v423, %v427
    %v432 = vand.u32 2147483647, %v407
    %vm433 = vcmp.eq.f32.partialorder %v432, 8.507059e+37
    %v434 = vand.u32 %v407, 2147483648
    %v435 = vor.u32 1.1754944e-38, %v434
    %v436 = vsel %vm433, %v435, %v431
    %v437 = vmul.f32 %v393, %v436
    %v438 = vmul.f32 %v422, %v24
    %v439 = vmul.f32 %v437, %v25
    %441 = vset.pattern.permute.xlu0 0
    %442 = vperm.xlu0 %441, %v438
    %v443 = vpop.permute.xlu0 %442
    %446 = vset.pattern.permute.xlu0 0
    %447 = vperm.xlu0 %446, %v439
    %v448 = vpop.permute.xlu0 %447
    %v450 = vmul.f32 %v443, %v21
    %v451 = vmul.f32 %v448, %v22
    %v452 = vsel %vm48, %v450, 0.0
    %v453 = vrot.slane %v452, 4
    %v454 = vadd.f32 %v452, %v453
    %v455 = vrot.slane %v454, 2
    %v456 = vadd.f32 %v454, %v455
    %v457 = vrot.slane %v456, 1
    %v458 = vadd.f32 %v456, %v457
    %v459 = vsel %vm48, %v451, 0.0
    %v460 = vrot.slane %v459, 4
    %v461 = vadd.f32 %v459, %v460
    %v462 = vrot.slane %v461, 2
    %v463 = vadd.f32 %v461, %v462
    %v464 = vrot.slane %v463, 1
    %v465 = vadd.f32 %v463, %v464
    %vm468 = vcmask 1041409
    %v469 = vsel %vm468, %v465, %v458
    %vm471 = vcmask 58368
    %472 = vst.msk [vmem:[#allocation2] sm:$0x3] %vm471, %v469
    // Predicated region
    $region22: #{attention_layer.1} parent=1 // pred_check
      _
    $region23: #{attention_layer.1} parent=1 // pred_check_branch
      %474 = sbr.rel (0) target = $region25
    $region24: #{attention_layer.1} parent=1 // pred_region
      %476 = vsyncadd [#allocation3], 0
      %s478 = sshll.u32 [#allocation2], 4
      %s479 = int_to_ptr.vmem [resolvable:$true] %s478
      %s480 = sshll.u32 %s5, 4
      %s481 = int_to_ptr.hbm [resolvable:$true] %s480
      %483 = dma.vmem_to_hbm [thread:$0]  %s479, 32, %s481, [#allocation3]
    $region25: #{attention_layer.1} parent=1 // pred_fallthru
      _
    // Predicated region
    $region26: #{attention_layer.1} parent=1 // pred_check
      _
    $region27: #{attention_layer.1} parent=1 // pred_check_branch
      %485 = sbr.rel (0) target = $region29
    $region28: #{attention_layer.1} parent=1 // pred_region
      %487 = dma.done [#allocation3], 32
    $region29: #{attention_layer.1} parent=1 // pred_fallthru
      _
    %488 = vsyncpa [#allocation3], 1

</llo_original>
